<compile_context>
chip_gen: v7x
topology: tpu7x:2x2x1
jax: 0.10.0
libtpu: 0.0.40
codegen_flags: <defaults>
</compile_context>

<pallas_src>
import jax
import jax.numpy as jnp
from jax.experimental import pallas as pl
from jax.experimental.pallas import tpu as pltpu


def _decoder_kernel(x_ref, w1_ref, b1_ref, a_ref, w2x_ref, w2y_ref, b2_ref, o_ref):
    # x_ref: (TB, 512), w1_ref: (512, 128), b1/a/w2x/w2y: (1, 128), b2: (1, 2)
    x = x_ref[...]

    # Fused first layer for both heads: one 128-wide MXU matmul.
    h = jnp.dot(x, w1_ref[...], preferred_element_type=jnp.float32)  # (TB, 128)
    h = h + b1_ref[...]

    # PReLU with per-head alpha pre-broadcast into a (1, 128) vector.
    h = jnp.where(h >= 0, h, a_ref[...] * h)

    # Second layer (64 -> 1 per head): VPU multiply against pre-masked fused w2
    # rows + XLU lane reductions (avoids two pathological N=1 MXU matmuls and
    # any in-kernel iota/select).
    ox = jnp.sum(h * w2x_ref[...], axis=-1, keepdims=True)           # (TB, 1)
    oy = jnp.sum(h * w2y_ref[...], axis=-1, keepdims=True)           # (TB, 1)

    # Lane-packed output: col 0 = x head, col 1 = y head (+ fused biases).
    o_ref[...] = jnp.concatenate([ox, oy], axis=-1) + b2_ref[...]    # (TB, 2)


def _round_up(n, m):
    return ((n + m - 1) // m) * m


def decoder_forward(embedding, params, *, tile_b=None):
    """embedding: (B, 512) f32. params: dict with both heads' weights.
    Returns (output_x, output_y), each (B, 1) f32."""
    B, D = embedding.shape
    assert D == 512

    if tile_b is None:
        # Big tiles amortize the ~0.35us/step overhead; 1024x512x4B = 2 MiB
        # per buffer (4 MiB double-buffered) — comfortably inside the default
        # scoped-VMEM limit on every TPU generation.
        tile_b = 1024 if B >= 1024 else _round_up(B, 8)
    grid = (pl.cdiv(B, tile_b),)

    # --- Fuse both heads' parameters at wrapper time (cheap one-time XLA ops).
    zeros64 = jnp.zeros((1, 64), jnp.float32)
    w1 = jnp.concatenate([params["w1x"], params["w1y"]], axis=1)        # (512,128)
    b1 = jnp.concatenate([params["b1x"], params["b1y"]], axis=1)        # (1,128)
    alpha = jnp.concatenate(
        [jnp.broadcast_to(params["ax"], (1, 64)),
         jnp.broadcast_to(params["ay"], (1, 64))], axis=1)              # (1,128)
    w2x = jnp.concatenate([params["w2x"].T, zeros64], axis=1)          # (1,128)
    w2y = jnp.concatenate([zeros64, params["w2y"].T], axis=1)          # (1,128)
    b2 = jnp.concatenate([params["b2x"], params["b2y"]], axis=1)        # (1,2)

    const = lambda shape: pl.BlockSpec(shape, lambda i: (0, 0))

    out = pl.pallas_call(
        _decoder_kernel,
        out_shape=jax.ShapeDtypeStruct((B, 2), jnp.float32),
        grid=grid,
        in_specs=[
            pl.BlockSpec((tile_b, 512), lambda i: (i, 0)),  # streamed embedding
            const((512, 128)),                              # VMEM-resident weights
            const((1, 128)),
            const((1, 128)),
            const((1, 128)),
            const((1, 128)),
            const((1, 2)),
        ],
        out_specs=pl.BlockSpec((tile_b, 2), lambda i: (i, 0)),
        compiler_params=pltpu.CompilerParams(
            dimension_semantics=("parallel",),
        ),
    )(embedding, w1, b1, alpha, w2x, w2y, b2)

    return out[:, 0:1], out[:, 1:2]


def init_params(key):
    """Deterministic synthetic parameters matching the PyTorch shapes
    (weights stored as (in_features, out_features))."""
    ks = jax.random.split(key, 8)
    scale1 = 1.0 / jnp.sqrt(512.0)
    scale2 = 1.0 / jnp.sqrt(64.0)
    return {
        # decoder_x
        "w1x": jax.random.uniform(ks[0], (512, 64), jnp.float32, -scale1, scale1),
        "b1x": jax.random.uniform(ks[1], (1, 64), jnp.float32, -scale1, scale1),
        "ax": jnp.full((1, 1), 0.25, jnp.float32),   # PReLU default init
        "w2x": jax.random.uniform(ks[2], (64, 1), jnp.float32, -scale2, scale2),
        "b2x": jax.random.uniform(ks[3], (1, 1), jnp.float32, -scale2, scale2),
        # decoder_y
        "w1y": jax.random.uniform(ks[4], (512, 64), jnp.float32, -scale1, scale1),
        "b1y": jax.random.uniform(ks[5], (1, 64), jnp.float32, -scale1, scale1),
        "ay": jnp.full((1, 1), 0.25, jnp.float32),
        "w2y": jax.random.uniform(ks[6], (64, 1), jnp.float32, -scale2, scale2),
        "b2y": jax.random.uniform(ks[7], (1, 1), jnp.float32, -scale2, scale2),
    }


def reference_forward(embedding, p):
    def head(w1, b1, a, w2, b2):
        h = embedding @ w1 + b1
        h = jnp.where(h >= 0, h, a[0, 0] * h)
        return h @ w2 + b2
    return (head(p["w1x"], p["b1x"], p["ax"], p["w2x"], p["b2x"]),
            head(p["w1y"], p["b1y"], p["ay"], p["w2y"], p["b2y"]))


if __name__ == "__main__":
    key = jax.random.PRNGKey(0)
    k_emb, k_par = jax.random.split(key)
    params = init_params(k_par)

    # Small batch, single tile.
    B = 8
    embedding = jax.random.normal(k_emb, (B, 512), jnp.float32)
    out_x, out_y = decoder_forward(embedding, params)
    jax.block_until_ready((out_x, out_y))
    ref_x, ref_y = reference_forward(embedding, params)
    assert out_x.shape == (B, 1) and out_y.shape == (B, 1)
    assert jnp.allclose(out_x, ref_x, atol=1e-4, rtol=1e-4)
    assert jnp.allclose(out_y, ref_y, atol=1e-4, rtol=1e-4)

    # Multi-tile grid with a ragged last tile (exercises batch tiling/masking).
    B2 = 40
    embedding2 = jax.random.normal(k_emb, (B2, 512), jnp.float32)
    out_x2, out_y2 = decoder_forward(embedding2, params, tile_b=16)
    jax.block_until_ready((out_x2, out_y2))
    ref_x2, ref_y2 = reference_forward(embedding2, params)
    assert jnp.allclose(out_x2, ref_x2, atol=1e-4, rtol=1e-4)
    assert jnp.allclose(out_y2, ref_y2, atol=1e-4, rtol=1e-4)

    print("KERNEL_OK")
</pallas_src>

<mosaic_0001>
module attributes {stable_mosaic.version = 11 : i64} {
  func.func @_decoder_kernel(%arg0: i32, %arg1: memref<8x512xf32, #tpu.memory_space<vmem>>, %arg2: memref<512x128xf32, #tpu.memory_space<vmem>>, %arg3: memref<1x128xf32, #tpu.memory_space<vmem>>, %arg4: memref<1x128xf32, #tpu.memory_space<vmem>>, %arg5: memref<1x128xf32, #tpu.memory_space<vmem>>, %arg6: memref<1x128xf32, #tpu.memory_space<vmem>>, %arg7: memref<1x2xf32, #tpu.memory_space<vmem>>, %arg8: memref<8x2xf32, #tpu.memory_space<vmem>>) attributes {dimension_semantics = [#tpu.dimension_semantics<parallel>], iteration_bounds = array<i64: 1>, scalar_prefetch = 0 : i64, scratch_operands = 0 : i64, tpu.core_type = #tpu.core_type<tc>, window_params = [{transform_indices = @transform_0, window_bounds = array<i64: 8, 512>}, {pipeline_mode = #tpu.pipeline_mode<synchronous>, transform_indices = @transform_1, window_bounds = array<i64: 512, 128>}, {pipeline_mode = #tpu.pipeline_mode<synchronous>, transform_indices = @transform_2, window_bounds = array<i64: 1, 128>}, {pipeline_mode = #tpu.pipeline_mode<synchronous>, transform_indices = @transform_3, window_bounds = array<i64: 1, 128>}, {pipeline_mode = #tpu.pipeline_mode<synchronous>, transform_indices = @transform_4, window_bounds = array<i64: 1, 128>}, {pipeline_mode = #tpu.pipeline_mode<synchronous>, transform_indices = @transform_5, window_bounds = array<i64: 1, 128>}, {pipeline_mode = #tpu.pipeline_mode<synchronous>, transform_indices = @transform_6, window_bounds = array<i64: 1, 2>}, {transform_indices = @transform_7, window_bounds = array<i64: 8, 2>}]} {
    %c0 = arith.constant 0 : index
    %c0_0 = arith.constant 0 : index
    %0 = vector.load %arg1[%c0, %c0_0] : memref<8x512xf32, #tpu.memory_space<vmem>>, vector<8x512xf32>
    %c0_1 = arith.constant 0 : index
    %c0_2 = arith.constant 0 : index
    %1 = vector.load %arg2[%c0_1, %c0_2] : memref<512x128xf32, #tpu.memory_space<vmem>>, vector<512x128xf32>
    %cst = arith.constant dense<0.000000e+00> : vector<8x128xf32>
    %2 = tpu.matmul %0, %1, %cst {dimension_numbers = #tpu.dot_dimension_numbers<[1], [0], [0], [1], [0, 0, 1, 1], [], []>} : vector<8x512xf32>, vector<512x128xf32>, vector<8x128xf32> -> vector<8x128xf32>
    %c0_3 = arith.constant 0 : index
    %c0_4 = arith.constant 0 : index
    %3 = vector.load %arg3[%c0_3, %c0_4] : memref<1x128xf32, #tpu.memory_space<vmem>>, vector<1x128xf32>
    %4 = vector.broadcast %3 : vector<1x128xf32> to vector<8x128xf32>
    %5 = arith.addf %2, %4 : vector<8x128xf32>
    %cst_5 = arith.constant 0.000000e+00 : f32
    %6 = vector.broadcast %cst_5 : f32 to vector<8x128xf32>
    %7 = arith.cmpf oge, %5, %6 : vector<8x128xf32>
    %c0_6 = arith.constant 0 : index
    %c0_7 = arith.constant 0 : index
    %8 = vector.load %arg4[%c0_6, %c0_7] : memref<1x128xf32, #tpu.memory_space<vmem>>, vector<1x128xf32>
    %9 = vector.broadcast %8 : vector<1x128xf32> to vector<8x128xf32>
    %10 = arith.mulf %9, %5 : vector<8x128xf32>
    %11 = arith.select %7, %5, %10 : vector<8x128xi1>, vector<8x128xf32>
    %c0_8 = arith.constant 0 : index
    %c0_9 = arith.constant 0 : index
    %12 = vector.load %arg5[%c0_8, %c0_9] : memref<1x128xf32, #tpu.memory_space<vmem>>, vector<1x128xf32>
    %13 = vector.broadcast %12 : vector<1x128xf32> to vector<8x128xf32>
    %14 = arith.mulf %11, %13 : vector<8x128xf32>
    %cst_10 = arith.constant dense<0.000000e+00> : vector<8xf32>
    %15 = vector.multi_reduction <add>, %14, %cst_10 [1] : vector<8x128xf32> to vector<8xf32>
    %16 = vector.shape_cast %15 : vector<8xf32> to vector<8x1xf32>
    %c0_11 = arith.constant 0 : index
    %c0_12 = arith.constant 0 : index
    %17 = vector.load %arg6[%c0_11, %c0_12] : memref<1x128xf32, #tpu.memory_space<vmem>>, vector<1x128xf32>
    %18 = vector.broadcast %17 : vector<1x128xf32> to vector<8x128xf32>
    %19 = arith.mulf %11, %18 : vector<8x128xf32>
    %cst_13 = arith.constant dense<0.000000e+00> : vector<8xf32>
    %20 = vector.multi_reduction <add>, %19, %cst_13 [1] : vector<8x128xf32> to vector<8xf32>
    %21 = vector.shape_cast %20 : vector<8xf32> to vector<8x1xf32>
    %22 = tpu.concatenate %16, %21 in 1 : vector<8x1xf32>, vector<8x1xf32> -> vector<8x2xf32>
    %c0_14 = arith.constant 0 : index
    %c0_15 = arith.constant 0 : index
    %23 = vector.load %arg7[%c0_14, %c0_15] : memref<1x2xf32, #tpu.memory_space<vmem>>, vector<1x2xf32>
    %24 = vector.broadcast %23 : vector<1x2xf32> to vector<8x2xf32>
    %25 = arith.addf %22, %24 : vector<8x2xf32>
    %c0_16 = arith.constant 0 : index
    %c0_17 = arith.constant 0 : index
    %26 = vector.load %arg8[%c0_16, %c0_17] : memref<8x2xf32, #tpu.memory_space<vmem>>, vector<8x2xf32>
    tpu.vector_store %arg8[%c0_16, %c0_17], %25 {strides = array<i32>} : memref<8x2xf32, #tpu.memory_space<vmem>>, vector<8x2xf32>,
    return
  }
  func.func @transform_0(%arg0: i32) -> (i32, i32) {
    %c0_i32 = arith.constant 0 : i32
    %c0_i32_0 = arith.constant 0 : i32
    return %arg0, %c0_i32 : i32, i32
  }
  func.func @transform_1(%arg0: i32) -> (i32, i32) {
    %c0_i32 = arith.constant 0 : i32
    %c0_i32_0 = arith.constant 0 : i32
    %c0_i32_1 = arith.constant 0 : i32
    return %c0_i32, %c0_i32_0 : i32, i32
  }
  func.func @transform_2(%arg0: i32) -> (i32, i32) {
    %c0_i32 = arith.constant 0 : i32
    %c0_i32_0 = arith.constant 0 : i32
    %c0_i32_1 = arith.constant 0 : i32
    return %c0_i32, %c0_i32_0 : i32, i32
  }
  func.func @transform_3(%arg0: i32) -> (i32, i32) {
    %c0_i32 = arith.constant 0 : i32
    %c0_i32_0 = arith.constant 0 : i32
    %c0_i32_1 = arith.constant 0 : i32
    return %c0_i32, %c0_i32_0 : i32, i32
  }
  func.func @transform_4(%arg0: i32) -> (i32, i32) {
    %c0_i32 = arith.constant 0 : i32
    %c0_i32_0 = arith.constant 0 : i32
    %c0_i32_1 = arith.constant 0 : i32
    return %c0_i32, %c0_i32_0 : i32, i32
  }
  func.func @transform_5(%arg0: i32) -> (i32, i32) {
    %c0_i32 = arith.constant 0 : i32
    %c0_i32_0 = arith.constant 0 : i32
    %c0_i32_1 = arith.constant 0 : i32
    return %c0_i32, %c0_i32_0 : i32, i32
  }
  func.func @transform_6(%arg0: i32) -> (i32, i32) {
    %c0_i32 = arith.constant 0 : i32
    %c0_i32_0 = arith.constant 0 : i32
    %c0_i32_1 = arith.constant 0 : i32
    return %c0_i32, %c0_i32_0 : i32, i32
  }
  func.func @transform_7(%arg0: i32) -> (i32, i32) {
    %c0_i32 = arith.constant 0 : i32
    %c0_i32_0 = arith.constant 0 : i32
    return %arg0, %c0_i32 : i32, i32
  }
}

</mosaic_0001>

<llo_original>
// kernel: tpu_custom_call.1
$region0: #{tpu_custom_call.1}
  #allocation0 [shape = 'u32[]', space=smem, size = 0x4, offset = 0x4, fixed_abs, tag = 'smem constant byte address 0x4 - core index']
  #allocation1 [shape = 'u32[144,128]{1,0:T(1,128)}', space=vmem, size = 0x12000, scoped, tag = 'internal scratch']
  %s0 = inlined_call_operand.hbm [shape: f32[8,512], index: 0, kind: input, shape index: {}]
  %s1 = inlined_call_operand.hbm [shape: f32[512,128], index: 1, kind: input, shape index: {}]
  %s2 = inlined_call_operand.vmem [shape: f32[1,128], index: 2, kind: input, shape index: {}]
  %s3 = inlined_call_operand.vmem [shape: f32[1,128], index: 3, kind: input, shape index: {}]
  %s4 = inlined_call_operand.vmem [shape: f32[1,128], index: 4, kind: input, shape index: {}]
  %s5 = inlined_call_operand.vmem [shape: f32[1,128], index: 5, kind: input, shape index: {}]
  %s6 = inlined_call_operand.vmem [shape: f32[1,2], index: 6, kind: input, shape index: {}]
  %s7 = inlined_call_operand.vmem [shape: f32[8,2], index: 7, kind: output, shape index: {}]
  %s8 = sld [smem:[#allocation0]]
  $region46: #{tpu_custom_call.1} parent=0
    _
  %s10 = ssub.s32 1, %s8
  %s11 = scalar_select 0, %s10, %s8
  $region1: #{tpu_custom_call.1} parent=0
    #allocation2 [shape = 'u8[16384]{0}', space=vmem, size = 0x4000, scoped, tag = 'input window, operand 0, single buffered']
    #allocation3 [shape = 's32[1]{0}', space=sflag, size = 0x4, scoped, tag = 'scoped memory for tpu_custom_call.1']
    #allocation4 [shape = 'u8[262144]{0}', space=vmem, size = 0x40000, scoped, tag = 'input window, operand 1, single buffered']
    #allocation5 [shape = 's32[1]{0}', space=sflag, size = 0x4, scoped, tag = 'scoped memory for tpu_custom_call.1']
    %12 = vsyncpa [#allocation3], 0
    %13 = vsyncpa [#allocation5], 0
    // Predicated region
    $region2: #{tpu_custom_call.1} parent=1 // pred_check
      _
    $region3: #{tpu_custom_call.1} parent=1 // pred_check_branch
      %15 = sbr.rel (0) target = $region5
    $region4: #{tpu_custom_call.1} parent=1 // pred_region
      %s17 = ssub.s32 512, 512
      %18 = vsyncadd [#allocation3], %s17
      %s20 = sshll.u32 [#allocation2], 4
      %s21 = int_to_ptr.vmem [resolvable:$true] %s20
      %23 = dma.hbm_to_vmem [thread:$0]  %s0, 512, %s21, [#allocation3]
    $region5: #{tpu_custom_call.1} parent=1 // pred_fallthru
      _
    // Predicated region
    $region6: #{tpu_custom_call.1} parent=1 // pred_check
      _
    $region7: #{tpu_custom_call.1} parent=1 // pred_check_branch
      %25 = sbr.rel (0) target = $region9
    $region8: #{tpu_custom_call.1} parent=1 // pred_region
      %s27 = ssub.s32 8192, 8192
      %28 = vsyncadd [#allocation5], %s27
      %s29 = sshll.u32 [#allocation4], 4
      %s30 = int_to_ptr.vmem [resolvable:$true] %s29
      %35 = dma.hbm_to_vmem [thread:$0]  %s1, 8192, %s30, [#allocation5], 128, 128, 8
    $region9: #{tpu_custom_call.1} parent=1 // pred_fallthru
      _
    // Predicated region
    $region10: #{tpu_custom_call.1} parent=1 // pred_check
      _
    $region11: #{tpu_custom_call.1} parent=1 // pred_check_branch
      %37 = sbr.rel (0) target = $region13
    $region12: #{tpu_custom_call.1} parent=1 // pred_region
      _
    $region13: #{tpu_custom_call.1} parent=1 // pred_fallthru
      _
    // Predicated region
    $region14: #{tpu_custom_call.1} parent=1 // pred_check
      _
    $region15: #{tpu_custom_call.1} parent=1 // pred_check_branch
      %39 = sbr.rel (0) target = $region17
    $region16: #{tpu_custom_call.1} parent=1 // pred_region
      _
    $region17: #{tpu_custom_call.1} parent=1 // pred_fallthru
      _
    // Predicated region
    $region18: #{tpu_custom_call.1} parent=1 // pred_check
      _
    $region19: #{tpu_custom_call.1} parent=1 // pred_check_branch
      %41 = sbr.rel (0) target = $region21
    $region20: #{tpu_custom_call.1} parent=1 // pred_region
      _
    $region21: #{tpu_custom_call.1} parent=1 // pred_fallthru
      _
    // Predicated region
    $region22: #{tpu_custom_call.1} parent=1 // pred_check
      _
    $region23: #{tpu_custom_call.1} parent=1 // pred_check_branch
      %43 = sbr.rel (0) target = $region25
    $region24: #{tpu_custom_call.1} parent=1 // pred_region
      _
    $region25: #{tpu_custom_call.1} parent=1 // pred_fallthru
      _
    // Predicated region
    $region26: #{tpu_custom_call.1} parent=1 // pred_check
      _
    $region27: #{tpu_custom_call.1} parent=1 // pred_check_branch
      %45 = sbr.rel (0) target = $region29
    $region28: #{tpu_custom_call.1} parent=1 // pred_region
      _
    $region29: #{tpu_custom_call.1} parent=1 // pred_fallthru
      _
    // Predicated region
    $region30: #{tpu_custom_call.1} parent=1 // pred_check
      _
    $region31: #{tpu_custom_call.1} parent=1 // pred_check_branch
      %47 = sbr.rel (0) target = $region33
    $region32: #{tpu_custom_call.1} parent=1 // pred_region
      %48 = dma.done [#allocation3], 512
    $region33: #{tpu_custom_call.1} parent=1 // pred_fallthru
      _
    // Predicated region
    $region34: #{tpu_custom_call.1} parent=1 // pred_check
      _
    $region35: #{tpu_custom_call.1} parent=1 // pred_check_branch
      %50 = sbr.rel (0) target = $region37
    $region36: #{tpu_custom_call.1} parent=1 // pred_region
      %51 = dma.done [#allocation5], 8192
    $region37: #{tpu_custom_call.1} parent=1 // pred_fallthru
      _
    %v52 = vld [vmem:[#allocation2] sm:$0xff]
    %v53 = vld [vmem:[#allocation2 + $0x8] sm:$0xff]
    %v54 = vld [vmem:[#allocation2 + $0x10] sm:$0xff]
    %v55 = vld [vmem:[#allocation2 + $0x18] sm:$0xff]
    %v56 = vld [vmem:[#allocation4] sm:$0xff]
    %v57 = vld [vmem:[#allocation4 + $0x8] sm:$0xff]
    %v58 = vld [vmem:[#allocation4 + $0x10] sm:$0xff]
    %v59 = vld [vmem:[#allocation4 + $0x18] sm:$0xff]
    %v60 = vld [vmem:[#allocation4 + $0x20] sm:$0xff]
    %v61 = vld [vmem:[#allocation4 + $0x28] sm:$0xff]
    %v62 = vld [vmem:[#allocation4 + $0x30] sm:$0xff]
    %v63 = vld [vmem:[#allocation4 + $0x38] sm:$0xff]
    %v64 = vld [vmem:[#allocation4 + $0x40] sm:$0xff]
    %v65 = vld [vmem:[#allocation4 + $0x48] sm:$0xff]
    %v66 = vld [vmem:[#allocation4 + $0x50] sm:$0xff]
    %v67 = vld [vmem:[#allocation4 + $0x58] sm:$0xff]
    %v68 = vld [vmem:[#allocation4 + $0x60] sm:$0xff]
    %v69 = vld [vmem:[#allocation4 + $0x68] sm:$0xff]
    %v70 = vld [vmem:[#allocation4 + $0x70] sm:$0xff]
    %v71 = vld [vmem:[#allocation4 + $0x78] sm:$0xff]
    %v72 = vld [vmem:[#allocation4 + $0x80] sm:$0xff]
    %v73 = vld [vmem:[#allocation4 + $0x88] sm:$0xff]
    %v74 = vld [vmem:[#allocation4 + $0x90] sm:$0xff]
    %v75 = vld [vmem:[#allocation4 + $0x98] sm:$0xff]
    %v76 = vld [vmem:[#allocation4 + $0xa0] sm:$0xff]
    %v77 = vld [vmem:[#allocation4 + $0xa8] sm:$0xff]
    %v78 = vld [vmem:[#allocation4 + $0xb0] sm:$0xff]
    %v79 = vld [vmem:[#allocation4 + $0xb8] sm:$0xff]
    %v80 = vld [vmem:[#allocation4 + $0xc0] sm:$0xff]
    %v81 = vld [vmem:[#allocation4 + $0xc8] sm:$0xff]
    %v82 = vld [vmem:[#allocation4 + $0xd0] sm:$0xff]
    %v83 = vld [vmem:[#allocation4 + $0xd8] sm:$0xff]
    %v84 = vld [vmem:[#allocation4 + $0xe0] sm:$0xff]
    %v85 = vld [vmem:[#allocation4 + $0xe8] sm:$0xff]
    %v86 = vld [vmem:[#allocation4 + $0xf0] sm:$0xff]
    %v87 = vld [vmem:[#allocation4 + $0xf8] sm:$0xff]
    %v88 = vld [vmem:[#allocation4 + $0x100] sm:$0xff]
    %v89 = vld [vmem:[#allocation4 + $0x108] sm:$0xff]
    %v90 = vld [vmem:[#allocation4 + $0x110] sm:$0xff]
    %v91 = vld [vmem:[#allocation4 + $0x118] sm:$0xff]
    %v92 = vld [vmem:[#allocation4 + $0x120] sm:$0xff]
    %v93 = vld [vmem:[#allocation4 + $0x128] sm:$0xff]
    %v94 = vld [vmem:[#allocation4 + $0x130] sm:$0xff]
    %v95 = vld [vmem:[#allocation4 + $0x138] sm:$0xff]
    %v96 = vld [vmem:[#allocation4 + $0x140] sm:$0xff]
    %v97 = vld [vmem:[#allocation4 + $0x148] sm:$0xff]
    %v98 = vld [vmem:[#allocation4 + $0x150] sm:$0xff]
    %v99 = vld [vmem:[#allocation4 + $0x158] sm:$0xff]
    %v100 = vld [vmem:[#allocation4 + $0x160] sm:$0xff]
    %v101 = vld [vmem:[#allocation4 + $0x168] sm:$0xff]
    %v102 = vld [vmem:[#allocation4 + $0x170] sm:$0xff]
    %v103 = vld [vmem:[#allocation4 + $0x178] sm:$0xff]
    %v104 = vld [vmem:[#allocation4 + $0x180] sm:$0xff]
    %v105 = vld [vmem:[#allocation4 + $0x188] sm:$0xff]
    %v106 = vld [vmem:[#allocation4 + $0x190] sm:$0xff]
    %v107 = vld [vmem:[#allocation4 + $0x198] sm:$0xff]
    %v108 = vld [vmem:[#allocation4 + $0x1a0] sm:$0xff]
    %v109 = vld [vmem:[#allocation4 + $0x1a8] sm:$0xff]
    %v110 = vld [vmem:[#allocation4 + $0x1b0] sm:$0xff]
    %v111 = vld [vmem:[#allocation4 + $0x1b8] sm:$0xff]
    %v112 = vld [vmem:[#allocation4 + $0x1c0] sm:$0xff]
    %v113 = vld [vmem:[#allocation4 + $0x1c8] sm:$0xff]
    %v114 = vld [vmem:[#allocation4 + $0x1d0] sm:$0xff]
    %v115 = vld [vmem:[#allocation4 + $0x1d8] sm:$0xff]
    %v116 = vld [vmem:[#allocation4 + $0x1e0] sm:$0xff]
    %v117 = vld [vmem:[#allocation4 + $0x1e8] sm:$0xff]
    %v118 = vld [vmem:[#allocation4 + $0x1f0] sm:$0xff]
    %v119 = vld [vmem:[#allocation4 + $0x1f8] sm:$0xff]
    %v120 = vld [vmem:[%s2] sm:$0x1]
    %v122 = vlaneseq
    %v123 = vshrl.u32 %v122, 7
    %v124 = vsub.s32 0, %v123
    %v125 = vrot.slane %v120, %v124
    %127 = vmatprep.subr.mxu0 0.0
    %128 = vmatpush1.msra.mxu0 %v56
    %129 = vmatprep.subr.mxu0 0.0
    %130 = vmatpush1.msra.mxu0 %v57
    %131 = vmatprep.subr.mxu0 0.0
    %132 = vmatpush1.msra.mxu0 %v58
    %133 = vmatprep.subr.mxu0 0.0
    %134 = vmatpush1.msra.mxu0 %v59
    %135 = vmatprep.subr.mxu0 0.0
    %136 = vmatpush1.msra.mxu0 %v60
    %137 = vmatprep.subr.mxu0 0.0
    %138 = vmatpush1.msra.mxu0 %v61
    %139 = vmatprep.subr.mxu0 0.0
    %140 = vmatpush1.msra.mxu0 %v62
    %141 = vmatprep.subr.mxu0 0.0
    %142 = vmatpush1.msra.mxu0 %v63
    %143 = vmatprep.subr.mxu0 0.0
    %144 = vmatpush1.msra.mxu0 %v64
    %145 = vmatprep.subr.mxu0 0.0
    %146 = vmatpush1.msra.mxu0 %v65
    %147 = vmatprep.subr.mxu0 0.0
    %148 = vmatpush1.msra.mxu0 %v66
    %149 = vmatprep.subr.mxu0 0.0
    %150 = vmatpush1.msra.mxu0 %v67
    %151 = vmatprep.subr.mxu0 0.0
    %152 = vmatpush1.msra.mxu0 %v68
    %153 = vmatprep.subr.mxu0 0.0
    %154 = vmatpush1.msra.mxu0 %v69
    %155 = vmatprep.subr.mxu0 0.0
    %156 = vmatpush1.msra.mxu0 %v70
    %157 = vmatprep.subr.mxu0 0.0
    %158 = vmatpush1.msra.mxu0 %v71
    %159 = vmatprep.subr.mxu0 0.0
    %160 = vmatpush1.msra.mxu0 %v72
    %161 = vmatprep.subr.mxu0 0.0
    %162 = vmatpush1.msra.mxu0 %v73
    %163 = vmatprep.subr.mxu0 0.0
    %164 = vmatpush1.msra.mxu0 %v74
    %165 = vmatprep.subr.mxu0 0.0
    %166 = vmatpush1.msra.mxu0 %v75
    %167 = vmatprep.subr.mxu0 0.0
    %168 = vmatpush1.msra.mxu0 %v76
    %169 = vmatprep.subr.mxu0 0.0
    %170 = vmatpush1.msra.mxu0 %v77
    %171 = vmatprep.subr.mxu0 0.0
    %172 = vmatpush1.msra.mxu0 %v78
    %173 = vmatprep.subr.mxu0 0.0
    %174 = vmatpush1.msra.mxu0 %v79
    %175 = vmatprep.subr.mxu0 0.0
    %176 = vmatpush1.msra.mxu0 %v80
    %177 = vmatprep.subr.mxu0 0.0
    %178 = vmatpush1.msra.mxu0 %v81
    %179 = vmatprep.subr.mxu0 0.0
    %180 = vmatpush1.msra.mxu0 %v82
    %181 = vmatprep.subr.mxu0 0.0
    %182 = vmatpush1.msra.mxu0 %v83
    %183 = vmatprep.subr.mxu0 0.0
    %184 = vmatpush1.msra.mxu0 %v84
    %185 = vmatprep.subr.mxu0 0.0
    %186 = vmatpush1.msra.mxu0 %v85
    %187 = vmatprep.subr.mxu0 0.0
    %188 = vmatpush1.msra.mxu0 %v86
    %189 = vmatprep.subr.mxu0 0.0
    %190 = vmatpush1.msra.mxu0 %v87
    %191 = vmatprep.mubr.f32.mxu0 %v53
    %192 = vmatmul.mubr.f32.gmra.mrb[0].mxu0 %v52
    %v193 = vpop.f32.mrb[0].mxu0
    %v194 = vadd.f32 %v125, %v193
    %v195 = vpop.f32.mrb[0].mxu0
    %196 = vdwg.mxu0
    %197 = vmatprep.subr.mxu0 0.0
    %198 = vmatpush1.msra.mxu0 %v88
    %199 = vmatprep.subr.mxu0 0.0
    %200 = vmatpush1.msra.mxu0 %v89
    %201 = vmatprep.subr.mxu0 0.0
    %202 = vmatpush1.msra.mxu0 %v90
    %203 = vmatprep.subr.mxu0 0.0
    %204 = vmatpush1.msra.mxu0 %v91
    %205 = vmatprep.subr.mxu0 0.0
    %206 = vmatpush1.msra.mxu0 %v92
    %207 = vmatprep.subr.mxu0 0.0
    %208 = vmatpush1.msra.mxu0 %v93
    %209 = vmatprep.subr.mxu0 0.0
    %210 = vmatpush1.msra.mxu0 %v94
    %211 = vmatprep.subr.mxu0 0.0
    %212 = vmatpush1.msra.mxu0 %v95
    %213 = vmatprep.subr.mxu0 0.0
    %214 = vmatpush1.msra.mxu0 %v96
    %215 = vmatprep.subr.mxu0 0.0
    %216 = vmatpush1.msra.mxu0 %v97
    %217 = vmatprep.subr.mxu0 0.0
    %218 = vmatpush1.msra.mxu0 %v98
    %219 = vmatprep.subr.mxu0 0.0
    %220 = vmatpush1.msra.mxu0 %v99
    %221 = vmatprep.subr.mxu0 0.0
    %222 = vmatpush1.msra.mxu0 %v100
    %223 = vmatprep.subr.mxu0 0.0
    %224 = vmatpush1.msra.mxu0 %v101
    %225 = vmatprep.subr.mxu0 0.0
    %226 = vmatpush1.msra.mxu0 %v102
    %227 = vmatprep.subr.mxu0 0.0
    %228 = vmatpush1.msra.mxu0 %v103
    %229 = vmatprep.subr.mxu0 0.0
    %230 = vmatpush1.msra.mxu0 %v104
    %231 = vmatprep.subr.mxu0 0.0
    %232 = vmatpush1.msra.mxu0 %v105
    %233 = vmatprep.subr.mxu0 0.0
    %234 = vmatpush1.msra.mxu0 %v106
    %235 = vmatprep.subr.mxu0 0.0
    %236 = vmatpush1.msra.mxu0 %v107
    %237 = vmatprep.subr.mxu0 0.0
    %238 = vmatpush1.msra.mxu0 %v108
    %239 = vmatprep.subr.mxu0 0.0
    %240 = vmatpush1.msra.mxu0 %v109
    %241 = vmatprep.subr.mxu0 0.0
    %242 = vmatpush1.msra.mxu0 %v110
    %243 = vmatprep.subr.mxu0 0.0
    %244 = vmatpush1.msra.mxu0 %v111
    %245 = vmatprep.subr.mxu0 0.0
    %246 = vmatpush1.msra.mxu0 %v112
    %247 = vmatprep.subr.mxu0 0.0
    %248 = vmatpush1.msra.mxu0 %v113
    %249 = vmatprep.subr.mxu0 0.0
    %250 = vmatpush1.msra.mxu0 %v114
    %251 = vmatprep.subr.mxu0 0.0
    %252 = vmatpush1.msra.mxu0 %v115
    %253 = vmatprep.subr.mxu0 0.0
    %254 = vmatpush1.msra.mxu0 %v116
    %255 = vmatprep.subr.mxu0 0.0
    %256 = vmatpush1.msra.mxu0 %v117
    %257 = vmatprep.subr.mxu0 0.0
    %258 = vmatpush1.msra.mxu0 %v118
    %259 = vmatprep.subr.mxu0 0.0
    %260 = vmatpush1.msra.mxu0 %v119
    %261 = vmatprep.mubr.f32.mxu0 %v55
    %262 = vmatmul.mubr.f32.gmra.mrb[0].mxu0 %v54
    %v263 = vpop.f32.mrb[0].mxu0
    %v264 = vadd.f32 %v194, %v263
    %v265 = vpop.f32.mrb[0].mxu0
    %266 = vdwg.mxu0
    %vm267 = vcmp.ge.f32.partialorder %v264, 0.0
    %v268 = vld [vmem:[%s3] sm:$0x1]
    %v270 = vlaneseq
    %v271 = vshrl.u32 %v270, 7
    %v272 = vsub.s32 0, %v271
    %v273 = vrot.slane %v268, %v272
    %v275 = vmul.f32 %v273, %v264
    %v276 = vsel %vm267, %v264, %v275
    %v277 = vld [vmem:[%s4] sm:$0x1]
    %v279 = vlaneseq
    %v280 = vshrl.u32 %v279, 7
    %v281 = vsub.s32 0, %v280
    %v282 = vrot.slane %v277, %v281
    %v284 = vmul.f32 %v276, %v282
    %285 = vadd.xlane.f32.xlu0 %v284
    %v286 = vpop.xlane.xlu0 %285
    %v287 = vld [vmem:[%s5] sm:$0x1]
    %v289 = vlaneseq
    %v290 = vshrl.u32 %v289, 7
    %v291 = vsub.s32 0, %v290
    %v292 = vrot.slane %v287, %v291
    %v294 = vmul.f32 %v276, %v292
    %295 = vadd.xlane.f32.xlu0 %v294
    %v296 = vpop.xlane.xlu0 %295
    %vm297 = vcmask 7168
    %v298 = vsel %vm297, %v286, %v296
    %v299 = vld [vmem:[%s6] sm:$0x1]
    %v301 = vlaneseq
    %v302 = vshrl.u32 %v301, 7
    %v303 = vsub.s32 0, %v302
    %v304 = vrot.slane %v299, %v303
    %v306 = vadd.f32 %v298, %v304
    %vm307 = vcmask 15360
    %308 = vst.msk [vmem:[%s7] sm:$0xff] %vm307, %v306
    // Predicated region
    $region38: #{tpu_custom_call.1} parent=1 // pred_check
      _
    $region39: #{tpu_custom_call.1} parent=1 // pred_check_branch
      %310 = sbr.rel (0) target = $region41
    $region40: #{tpu_custom_call.1} parent=1 // pred_region
      _
    $region41: #{tpu_custom_call.1} parent=1 // pred_fallthru
      _
    // Predicated region
    $region42: #{tpu_custom_call.1} parent=1 // pred_check
      _
    $region43: #{tpu_custom_call.1} parent=1 // pred_check_branch
      %312 = sbr.rel (0) target = $region45
    $region44: #{tpu_custom_call.1} parent=1 // pred_region
      _
    $region45: #{tpu_custom_call.1} parent=1 // pred_fallthru
      _
    %313 = vsyncpa [#allocation3], 1
    %314 = vsyncpa [#allocation5], 1

</llo_original>
